<compile_context>
chip_gen: v5e
topology: v5e:2x2
jax: 0.10.0
libtpu: 0.0.40
codegen_flags: <defaults>
</compile_context>

<pallas_src>
import functools
import math

import jax
import jax.numpy as jnp
from jax.experimental import pallas as pl
from jax.experimental.pallas import tpu as pltpu


def _time_embedding_kernel(time_ref, out_ref, *, half_dim: int, neg_scale: float):
    # time_ref: (TB, 1) f32   out_ref: (TB, 2*half_dim) out_dtype
    t = time_ref[...]                                               # (TB, 1)
    dim = 2 * half_dim

    # In-kernel frequency + phase tables over the full dim lanes:
    #   lanes [0, half)      -> freq[k],   phase 0      (sin half)
    #   lanes [half, dim)    -> freq[k],   phase pi/2   (cos half, cos = sin(x+pi/2))
    lane = jax.lax.broadcasted_iota(jnp.int32, (1, dim), 1)         # (1, dim)
    is_sin = lane < half_dim
    k = jnp.where(is_sin, lane, lane - half_dim).astype(jnp.float32)
    freqs_full = jnp.exp(k * neg_scale)                             # (1, dim), EUP
    phase = jnp.where(is_sin, 0.0, math.pi / 2.0)                   # (1, dim)

    # Single lane-dense store: one multiply (VPU), one add (VPU), one sin (EUP),
    # one unmasked-as-possible vst.  No lane-offset partial store, no concat.
    out_ref[...] = jnp.sin(t * freqs_full + phase).astype(out_ref.dtype)


def _round_up(x: int, m: int) -> int:
    return ((x + m - 1) // m) * m


def time_embedding(
    time: jax.Array,
    dim: int,
    *,
    out_dtype=jnp.float32,
    target_block_bytes: int = 2 * 1024 * 1024,
) -> jax.Array:
    """time: (B,) float array -> (B, dim) sinusoidal embedding (default f32)."""
    assert dim % 2 == 0, "dim must be even"
    assert dim >= 4, "dim must be >= 4 (half_dim - 1 == 0 otherwise)"
    half_dim = dim // 2
    b = time.shape[0]

    neg_scale = -(math.log(10000.0) / (half_dim - 1))

    # Batch tile: cap so one output block is ~target_block_bytes (v5e scoped
    # VMEM default is 16 MiB; ~2 MiB tiles already sit near the HBM roofline),
    # and for B >= 16 force at least two grid steps so v7x's second TensorCore
    # gets work and the output DMA double-buffers.
    bytes_per_row = dim * jnp.dtype(out_dtype).itemsize
    cap = max(8, (target_block_bytes // max(bytes_per_row, 1)) // 8 * 8)
    if b < 16:
        tb = b  # single full-extent block; satisfies the (8, 128) rule as-is
    else:
        tb = max(8, min(cap, _round_up(pl.cdiv(b, 2), 8)))
    grid = (pl.cdiv(b, tb),)

    time_2d = time.astype(jnp.float32).reshape(b, 1)  # (B, 1)

    kernel = functools.partial(
        _time_embedding_kernel, half_dim=half_dim, neg_scale=neg_scale
    )

    return pl.pallas_call(
        kernel,
        out_shape=jax.ShapeDtypeStruct((b, dim), out_dtype),
        grid=grid,
        in_specs=[
            pl.BlockSpec((tb, 1), lambda i: (i, 0)),
        ],
        out_specs=pl.BlockSpec((tb, dim), lambda i: (i, 0)),
        compiler_params=pltpu.CompilerParams(
            dimension_semantics=("parallel",),
        ),
    )(time_2d)


def _reference(time: jax.Array, dim: int) -> jax.Array:
    # Pure-JAX transcription of the PyTorch forward.
    half_dim = dim // 2
    scale = math.log(10000.0) / (half_dim - 1)
    freqs = jnp.exp(jnp.arange(half_dim, dtype=jnp.float32) * -scale)
    emb = time.astype(jnp.float32)[:, None] * freqs[None, :]
    return jnp.concatenate([jnp.sin(emb), jnp.cos(emb)], axis=-1)


if __name__ == "__main__":
    key = jax.random.PRNGKey(0)
    batch = 8
    dim = 64

    # Integer diffusion-style timesteps in [0, 1000).
    time = jax.random.randint(key, (batch,), 0, 1000).astype(jnp.float32)

    out = jax.block_until_ready(time_embedding(time, dim))
    ref = _reference(time, dim)

    assert out.shape == (batch, dim), out.shape
    assert bool(jnp.all(jnp.isfinite(out))), "non-finite output"
    # sin/cos arguments reach ~1e3 rad; in-kernel (EUP) vs XLA transcendentals
    # can differ by O(1e-4) there, so compare with a tolerance sized for that.
    # Outputs are bounded by 1, so 5e-3 still flags any layout/indexing error.
    assert jnp.allclose(out, ref, atol=5e-3, rtol=1e-3), "mismatch vs reference"

    print("KERNEL_OK")
</pallas_src>

<mosaic_0001>
module attributes {stable_mosaic.version = 11 : i64} {
  func.func @_time_embedding_kernel(%arg0: i32, %arg1: memref<8x1xf32, #tpu.memory_space<vmem>>, %arg2: memref<8x64xf32, #tpu.memory_space<vmem>>) attributes {dimension_semantics = [#tpu.dimension_semantics<parallel>], iteration_bounds = array<i64: 1>, scalar_prefetch = 0 : i64, scratch_operands = 0 : i64, tpu.core_type = #tpu.core_type<tc>, window_params = [{transform_indices = @transform_0, window_bounds = array<i64: 8, 1>}, {transform_indices = @transform_1, window_bounds = array<i64: 8, 64>}]} {
    %c0 = arith.constant 0 : index
    %c0_0 = arith.constant 0 : index
    %0 = vector.load %arg1[%c0, %c0_0] : memref<8x1xf32, #tpu.memory_space<vmem>>, vector<8x1xf32>
    %1 = tpu.iota {dimensions = array<i32: 1>} : vector<1x64xi32>
    %c32_i32 = arith.constant 32 : i32
    %2 = vector.broadcast %c32_i32 : i32 to vector<1x64xi32>
    %3 = arith.cmpi slt, %1, %2 : vector<1x64xi32>
    %c32_i32_1 = arith.constant 32 : i32
    %4 = vector.broadcast %c32_i32_1 : i32 to vector<1x64xi32>
    %5 = arith.subi %1, %4 : vector<1x64xi32>
    %6 = arith.select %3, %1, %5 : vector<1x64xi1>, vector<1x64xi32>
    %7 = arith.sitofp %6 : vector<1x64xi32> to vector<1x64xf32>
    %cst = arith.constant -0.297107756 : f32
    %8 = vector.broadcast %cst : f32 to vector<1x64xf32>
    %9 = arith.mulf %7, %8 : vector<1x64xf32>
    %10 = math.exp %9 : vector<1x64xf32>
    %cst_2 = arith.constant 0.000000e+00 : f32
    %cst_3 = arith.constant 1.57079637 : f32
    %11 = vector.broadcast %cst_2 : f32 to vector<1x64xf32>
    %12 = vector.broadcast %cst_3 : f32 to vector<1x64xf32>
    %13 = arith.select %3, %11, %12 : vector<1x64xi1>, vector<1x64xf32>
    %14 = vector.broadcast %0 : vector<8x1xf32> to vector<8x64xf32>
    %15 = vector.broadcast %10 : vector<1x64xf32> to vector<8x64xf32>
    %16 = arith.mulf %14, %15 : vector<8x64xf32>
    %17 = vector.broadcast %13 : vector<1x64xf32> to vector<8x64xf32>
    %18 = arith.addf %16, %17 : vector<8x64xf32>
    %19 = math.sin %18 : vector<8x64xf32>
    %c0_4 = arith.constant 0 : index
    %c0_5 = arith.constant 0 : index
    %20 = vector.load %arg2[%c0_4, %c0_5] : memref<8x64xf32, #tpu.memory_space<vmem>>, vector<8x64xf32>
    tpu.vector_store %arg2[%c0_4, %c0_5], %19 {strides = array<i32>} : memref<8x64xf32, #tpu.memory_space<vmem>>, vector<8x64xf32>,
    return
  }
  func.func @transform_0(%arg0: i32) -> (i32, i32) {
    %c0_i32 = arith.constant 0 : i32
    %c0_i32_0 = arith.constant 0 : i32
    return %arg0, %c0_i32 : i32, i32
  }
  func.func @transform_1(%arg0: i32) -> (i32, i32) {
    %c0_i32 = arith.constant 0 : i32
    %c0_i32_0 = arith.constant 0 : i32
    return %arg0, %c0_i32 : i32, i32
  }
}

</mosaic_0001>

<llo_original>
// kernel: tpu_custom_call.1
$region0: #{tpu_custom_call.1}
  #allocation0 [shape = 'u32[]', space=smem, size = 0x4, offset = 0x4, fixed_abs, tag = 'smem constant byte address 0x4 - core index']
  #allocation1 [shape = 'u32[72,128]{1,0:T(1,128)}', space=vmem, size = 0x9000, scoped, tag = 'internal scratch']
  %s0 = inlined_call_operand.vmem [shape: f32[8,1], index: 0, kind: input, shape index: {}]
  %s1 = inlined_call_operand.hbm [shape: f32[8,64], index: 1, kind: output, shape index: {}]
  %s2 = sld [smem:[#allocation0]]
  $region14: #{tpu_custom_call.1} parent=0
    _
  %s4 = ssub.s32 1, %s2
  %s5 = scalar_select 0, %s4, %s2
  $region1: #{tpu_custom_call.1} parent=0
    #allocation2 [shape = 'u8[4096]{0}', space=vmem, size = 0x1000, scoped, tag = 'output window, operand 0, single buffered']
    #allocation3 [shape = 's32[1]{0}', space=sflag, size = 0x4, scoped, tag = 'scoped memory for tpu_custom_call.1']
    %6 = vsyncpa [#allocation3], 0
    // Predicated region
    $region2: #{tpu_custom_call.1} parent=1 // pred_check
      _
    $region3: #{tpu_custom_call.1} parent=1 // pred_check_branch
      %8 = sbr.rel (0) target = $region5
    $region4: #{tpu_custom_call.1} parent=1 // pred_region
      _
    $region5: #{tpu_custom_call.1} parent=1 // pred_fallthru
      _
    %v9 = vld [vmem:[%s0] sm:$0xff]
    %v10 = vlaneseq
    %v11 = vand.u32 %v10, 127
    %vm12 = vcmp.lt.s32.totalorder %v11, 32
    %v13 = vsub.s32 %v11, 32
    %v14 = vsel %vm12, %v11, %v13
    %v15 = vcvt.s32.f32 %v14
    %v16 = vmul.f32 %v15, -0.29710776
    %v17 = vmul.f32 %v16, 1.442695
    %v18 = vpow.pop %v17
    %v19 = vsel %vm12, 0.0, 1.5707964
    %21 = vset.pattern.permute.xlu0 0
    %22 = vperm.xlu0 %21, %v9
    %v23 = vpop.permute.xlu0 %22
    %v25 = vmul.f32 %v23, %v18
    %v26 = vadd.f32 %v25, %v19
    %v27 = vand.u32 2147483647, %v26
    %vm28 = vcmp.le.f32.partialorder %v27, 0.7853982
    %vm29 = vcmp.lt.s32.totalorder %v26, 0
    %v30 = vand.u32 %v26, 2139095040
    %v31 = vshrl.u32 %v30, 23
    %v32 = vsub.s32 %v31, 127
    %v33 = vand.u32 2147483647, %v26
    %v34 = vand.u32 %v33, 8388607
    %v35 = vor.u32 %v34, 8388608
    %v36 = vsub.s32 0, %v35
    %v37 = vadd.s32 %v32, 1
    %vm38 = vcmp.gt.s32.totalorder %v37, 0
    %v39 = vsel %vm38, %v37, 0
    %v40 = vshrl.u32 %v39, 5
    %v41 = vand.u32 %v39, 31
    %v42 = vsub.s32 32, %v41
    %v43 = vshrl.u32 683565275, %v42
    %v44 = vshll.u32 683565275, %v41
    %v45 = vshrl.u32 2475754826, %v42
    %v46 = vor.u32 %v44, %v45
    %v47 = vshll.u32 2475754826, %v41
    %v48 = vshrl.u32 2131351028, %v42
    %v49 = vor.u32 %v47, %v48
    %v50 = vshll.u32 2131351028, %v41
    %v51 = vshrl.u32 2102212464, %v42
    %v52 = vor.u32 %v50, %v51
    %v53 = vshll.u32 2102212464, %v41
    %v54 = vshrl.u32 920167782, %v42
    %v55 = vor.u32 %v53, %v54
    %v56 = vshll.u32 920167782, %v41
    %v57 = vshrl.u32 1326507024, %v42
    %v58 = vor.u32 %v56, %v57
    %vm59 = vcmp.lt.s32.totalorder %v40, 1
    %vm60 = vcmp.lt.s32.totalorder %v40, 2
    %vm61 = vcmp.lt.s32.totalorder %v40, 3
    %vm62 = vcmp.lt.s32.totalorder %v40, 4
    %v63 = vsel %vm59, %v43, %v46
    %v64 = vsel %vm62, %v52, 2102212464
    %v65 = vsel %vm61, %v49, %v64
    %v66 = vsel %vm60, %v63, %v65
    %v67 = vsel %vm59, %v46, %v49
    %v68 = vsel %vm62, %v55, 920167782
    %v69 = vsel %vm61, %v52, %v68
    %v70 = vsel %vm60, %v67, %v69
    %v71 = vsel %vm59, %v49, %v52
    %v72 = vsel %vm62, %v58, 1326507024
    %v73 = vsel %vm61, %v55, %v72
    %v74 = vsel %vm60, %v71, %v73
    %v75 = vshll.u32 %v35, 8
    %v76 = vand.u32 %v75, 65535
    %v77 = vshrl.u32 %v75, 16
    %v78 = vand.u32 %v74, 65535
    %v79 = vshrl.u32 %v74, 16
    %v80 = vmul.u32 %v76, %v78
    %v81 = vmul.u32 %v76, %v79
    %v82 = vmul.u32 %v77, %v78
    %v83 = vmul.u32 %v77, %v79
    %v84 = vshll.u32 %v81, 16
    %v85 = vshrl.u32 %v81, 16
    %v86 = vshll.u32 %v82, 16
    %v87 = vshrl.u32 %v82, 16
    %vm88 = vc.u32 %v80, %v84
    %v89 = vsel %vm88, 1, 0
    %v90 = vadd.s32 %v80, %v84
    %v91 = vadd.s32 %v83, %v89
    %vm92 = vc.u32 %v90, %v86
    %v93 = vsel %vm92, 1, 0
    %v94 = vadd.s32 %v90, %v86
    %v95 = vadd.s32 %v91, %v93
    %v96 = vadd.s32 %v95, %v85
    %v97 = vadd.s32 %v96, %v87
    %v98 = vand.u32 %v75, 65535
    %v99 = vshrl.u32 %v75, 16
    %v100 = vand.u32 %v70, 65535
    %v101 = vshrl.u32 %v70, 16
    %v102 = vmul.u32 %v98, %v100
    %v103 = vmul.u32 %v98, %v101
    %v104 = vmul.u32 %v99, %v100
    %v105 = vmul.u32 %v99, %v101
    %v106 = vshll.u32 %v103, 16
    %v107 = vshrl.u32 %v103, 16
    %v108 = vshll.u32 %v104, 16
    %v109 = vshrl.u32 %v104, 16
    %vm110 = vc.u32 %v102, %v106
    %v111 = vsel %vm110, 1, 0
    %v112 = vadd.s32 %v102, %v106
    %v113 = vadd.s32 %v105, %v111
    %vm114 = vc.u32 %v112, %v108
    %v115 = vsel %vm114, 1, 0
    %v116 = vadd.s32 %v112, %v108
    %v117 = vadd.s32 %v113, %v115
    %v118 = vadd.s32 %v117, %v107
    %v119 = vadd.s32 %v118, %v109
    %v120 = vmul.u32 %v75, %v66
    %v121 = vadd.s32 %v97, %v116
    %vm122 = vc.u32 %v97, %v116
    %v123 = vadd.s32 %v119, 1
    %v124 = vsel %vm122, %v123, %v119
    %v125 = vadd.s32 %v120, %v124
    %v126 = vadd.s32 %v125, 536870912
    %v127 = vshrl.u32 %v126, 30
    %v128 = vshll.u32 %v127, 30
    %v129 = vsub.s32 %v125, %v128
    %vm130 = vcmp.lt.s32.totalorder %v129, 0
    %v131 = vsub.s32 0, %v129
    %v132 = vsel %vm130, %v131, %v129
    %v133 = vclz %v132
    %v134 = vsub.s32 %v133, 2
    %vm135 = vcmp.gt.s32.totalorder 0, %v134
    %v136 = vsel %vm135, 0, %v134
    %v137 = vsub.s32 32, %v136
    %v138 = vshll.u32 %v129, %v136
    %v139 = vshrl.u32 %v121, %v137
    %v140 = vor.u32 %v138, %v139
    %v141 = vsub.s32 4294967266, %v136
    %v142 = vadd.s32 %v141, 127
    %v143 = vshll.u32 %v142, 23
    %v144 = vor.u32 4788187, %v143
    %v145 = vand.u32 2147483647, %v144
    %v147 = vcvt.s32.f32 %v140
    %v148 = vmul.f32 %v147, %v145
    %v149 = vxor.u32 %v148, 2147483648
    %v150 = vsel %vm29, %v149, %v148
    %v151 = vsub.s32 4, %v127
    %v152 = vsel %vm29, %v151, %v127
    %v153 = vsel %vm28, %v26, %v150
    %v154 = vsel %vm28, 0, %v152
    %v155 = vmul.f32 %v153, %v153
    %v156 = vmul.f32 %v155, -0.001358992
    %v157 = vadd.f32 %v156, 0.041655596
    %v158 = vmul.f32 %v155, %v157
    %v159 = vadd.f32 %v158, -0.4999988
    %v160 = vmul.f32 %v155, %v159
    %v161 = vadd.f32 1.0, %v160
    %v162 = vmul.f32 %v153, %v153
    %v163 = vmul.f32 %v162, -0.00019511016
    %v164 = vadd.f32 %v163, 0.008332121
    %v165 = vmul.f32 %v162, %v164
    %v166 = vadd.f32 %v165, -0.16666654
    %v167 = vmul.f32 %v162, %v166
    %v168 = vadd.f32 %v167, 1.0
    %v169 = vmul.f32 %v168, %v153
    %vm170 = vweird.f32 %v26
    %v171 = vadd.s32 %v154, 3
    %v172 = vand.u32 %v171, 3
    %vm173 = vcmp.lt.s32.totalorder %v172, 2
    %vm174 = vcmp.eq.s32.totalorder %v172, 0
    %v175 = vxor.u32 %v169, 2147483648
    %v176 = vsel %vm174, %v161, %v175
    %vm177 = vcmp.eq.s32.totalorder %v172, 2
    %v178 = vxor.u32 %v161, 2147483648
    %v179 = vsel %vm177, %v178, %v169
    %v180 = vsel %vm173, %v176, %v179
    %v181 = vsel %vm170, nan, %v180
    %vm182 = vcmask 523264
    %183 = vst.msk [vmem:[#allocation2] sm:$0xff] %vm182, %v181
    // Predicated region
    $region6: #{tpu_custom_call.1} parent=1 // pred_check
      _
    $region7: #{tpu_custom_call.1} parent=1 // pred_check_branch
      %185 = sbr.rel (0) target = $region9
    $region8: #{tpu_custom_call.1} parent=1 // pred_region
      %187 = vsyncadd [#allocation3], 0
      %s189 = sshll.u32 [#allocation2], 4
      %s190 = int_to_ptr.vmem [resolvable:$true] %s189
      %s191 = sshll.u32 %s1, 4
      %s192 = int_to_ptr.hbm [resolvable:$true] %s191
      %194 = dma.vmem_to_hbm [thread:$0]  %s190, 128, %s192, [#allocation3]
    $region9: #{tpu_custom_call.1} parent=1 // pred_fallthru
      _
    // Predicated region
    $region10: #{tpu_custom_call.1} parent=1 // pred_check
      _
    $region11: #{tpu_custom_call.1} parent=1 // pred_check_branch
      %196 = sbr.rel (0) target = $region13
    $region12: #{tpu_custom_call.1} parent=1 // pred_region
      %198 = dma.done [#allocation3], 128
    $region13: #{tpu_custom_call.1} parent=1 // pred_fallthru
      _
    %199 = vsyncpa [#allocation3], 1

</llo_original>
